<compile_context>
chip_gen: v7x
topology: tpu7x:2x2x1
jax: 0.10.0
libtpu: 0.0.40
codegen_flags: <defaults>
</compile_context>

<pallas_src>
import math

import jax
import jax.numpy as jnp
from jax import lax
from jax.experimental import pallas as pl
from jax.experimental.pallas import tpu as pltpu


# ----------------------------- Pallas kernel --------------------------------
def _se_attention_kernel(x_ref, w1_ref, w2_ref, o_ref):
    # x_ref : (BT, C, HW)  BT batch elements' activations (HW lane-dense)
    # w1_ref: (Cr, C)      first Linear weight  (PyTorch (out, in) layout)
    # w2_ref: (C, Cr)      second Linear weight (PyTorch (out, in) layout)
    # o_ref : (BT, C, HW)
    x = x_ref[...]                                            # (BT, C, HW) f32
    hw = x.shape[-1]

    # --- squeeze: global average pool over spatial (lane reduction -> XLU) ---
    pooled = jnp.sum(x, axis=-1) * (1.0 / hw)                 # (BT, C)

    # --- excitation: Linear -> ReLU -> Linear -> Sigmoid (tiny, MXU/EUP) ---
    # Contract pooled's C axis against the weights' "in" axis directly
    # (no explicit transpose materialized in VMEM).
    h = lax.dot_general(pooled, w1_ref[...],
                        (((1,), (1,)), ((), ())),
                        preferred_element_type=jnp.float32)   # (BT, Cr)
    h = jnp.maximum(h, 0.0)
    a = lax.dot_general(h, w2_ref[...],
                        (((1,), (1,)), ((), ())),
                        preferred_element_type=jnp.float32)   # (BT, C)
    attn = 1.0 / (1.0 + jnp.exp(-a))                          # exact sigmoid

    # --- residual add (module does x + attn.expand_as(x)) ---
    o_ref[...] = (x + attn[:, :, None]).astype(o_ref.dtype)


# ----------------------------- Module wrapper --------------------------------
def se_attention_block(x, w1, w2):
    """Equivalent of SEAttentionBlock.forward.

    x : (B, C, H, W) float32 (NCHW, PyTorch layout)
    w1: (C//r, C)    float32 (nn.Linear weight, no bias)
    w2: (C, C//r)    float32 (nn.Linear weight, no bias)
    returns (B, C, H, W) float32
    """
    B, C, H, W = x.shape
    Cr = w1.shape[0]
    HW = H * W

    # Free reshape (collapses trailing dims, no data movement / transpose).
    x3 = x.reshape(B, C, HW)

    # Pick the batch tile: largest divisor of B whose per-block slab stays
    # under ~4 MiB (fewer grid steps, bigger DMAs, same HBM traffic).
    elem_bytes = C * HW * x.dtype.itemsize
    max_block_bytes = 4 << 20
    bt = 1
    for cand in range(B, 0, -1):
        if B % cand == 0 and cand * elem_bytes <= max_block_bytes:
            bt = cand
            break
    block_bytes = bt * elem_bytes

    # Explicit VMEM budget: double-buffered input + output slabs + resident
    # weights + slack.  Clamped well under v7x's 64 MiB physical VMEM.
    w_bytes = (w1.size + w2.size) * 4
    vmem_limit = int(min(max(4 * block_bytes + 2 * w_bytes + (2 << 20), 16 << 20),
                         48 << 20))

    cost = pl.CostEstimate(
        flops=2 * B * C * HW + 4 * B * C * Cr,
        transcendentals=B * C,
        bytes_accessed=2 * B * C * HW * x.dtype.itemsize + 2 * C * Cr * 4,
    )

    out = pl.pallas_call(
        _se_attention_kernel,
        out_shape=jax.ShapeDtypeStruct((B, C, HW), x.dtype),
        grid_spec=pltpu.PrefetchScalarGridSpec(
            num_scalar_prefetch=0,
            grid=(B // bt,),
            in_specs=[
                pl.BlockSpec((bt, C, HW), lambda b: (b, 0, 0)),
                pl.BlockSpec((Cr, C), lambda b: (0, 0)),
                pl.BlockSpec((C, Cr), lambda b: (0, 0)),
            ],
            out_specs=pl.BlockSpec((bt, C, HW), lambda b: (b, 0, 0)),
        ),
        compiler_params=pltpu.CompilerParams(
            dimension_semantics=("parallel",),
            vmem_limit_bytes=vmem_limit,
        ),
        cost_estimate=cost,
    )(x3, w1, w2)

    return out.reshape(B, C, H, W)


# ----------------------------- Pure-JAX reference ----------------------------
def _reference(x, w1, w2):
    pooled = jnp.mean(x, axis=(2, 3))                 # (B, C)
    h = jnp.maximum(pooled @ w1.T, 0.0)               # (B, C//r)
    attn = jax.nn.sigmoid(h @ w2.T)                   # (B, C)
    return x + attn[:, :, None, None]


if __name__ == "__main__":
    key = jax.random.PRNGKey(0)
    k_x, k_w1, k_w2 = jax.random.split(key, 3)

    # channels must be >= reduction for the bottleneck to be non-empty.
    B, C, H, W = 2, 32, 16, 16
    reduction = 16
    Cr = C // reduction

    x = jax.random.normal(k_x, (B, C, H, W), dtype=jnp.float32)

    # PyTorch nn.Linear default init: U(-1/sqrt(fan_in), 1/sqrt(fan_in)).
    b1 = 1.0 / math.sqrt(C)
    b2 = 1.0 / math.sqrt(Cr)
    w1 = jax.random.uniform(k_w1, (Cr, C), minval=-b1, maxval=b1, dtype=jnp.float32)
    w2 = jax.random.uniform(k_w2, (C, Cr), minval=-b2, maxval=b2, dtype=jnp.float32)

    out = jax.block_until_ready(se_attention_block(x, w1, w2))
    ref = jax.block_until_ready(_reference(x, w1, w2))

    assert out.shape == (B, C, H, W), out.shape
    assert jnp.allclose(out, ref, atol=1e-5, rtol=1e-5), \
        float(jnp.max(jnp.abs(out - ref)))

    print("KERNEL_OK")
</pallas_src>

<mosaic_0001>
module attributes {stable_mosaic.version = 11 : i64} {
  func.func @_se_attention_kernel(%arg0: i32, %arg1: memref<2x32x256xf32, #tpu.memory_space<vmem>>, %arg2: memref<2x32xf32, #tpu.memory_space<vmem>>, %arg3: memref<32x2xf32, #tpu.memory_space<vmem>>, %arg4: memref<2x32x256xf32, #tpu.memory_space<vmem>>) attributes {dimension_semantics = [#tpu.dimension_semantics<parallel>], iteration_bounds = array<i64: 1>, scalar_prefetch = 0 : i64, scratch_operands = 0 : i64, tpu.core_type = #tpu.core_type<tc>, window_params = [{transform_indices = @transform_0, window_bounds = array<i64: 2, 32, 256>}, {pipeline_mode = #tpu.pipeline_mode<synchronous>, transform_indices = @transform_1, window_bounds = array<i64: 2, 32>}, {pipeline_mode = #tpu.pipeline_mode<synchronous>, transform_indices = @transform_2, window_bounds = array<i64: 32, 2>}, {transform_indices = @transform_3, window_bounds = array<i64: 2, 32, 256>}]} {
    %c0 = arith.constant 0 : index
    %c0_0 = arith.constant 0 : index
    %c0_1 = arith.constant 0 : index
    %0 = vector.load %arg1[%c0, %c0_0, %c0_1] : memref<2x32x256xf32, #tpu.memory_space<vmem>>, vector<2x32x256xf32>
    %cst = arith.constant dense<0.000000e+00> : vector<2x32xf32>
    %1 = vector.multi_reduction <add>, %0, %cst [2] : vector<2x32x256xf32> to vector<2x32xf32>
    %cst_2 = arith.constant 3.906250e-03 : f32
    %2 = vector.broadcast %cst_2 : f32 to vector<2x32xf32>
    %3 = arith.mulf %1, %2 : vector<2x32xf32>
    %c0_3 = arith.constant 0 : index
    %c0_4 = arith.constant 0 : index
    %4 = vector.load %arg2[%c0_3, %c0_4] : memref<2x32xf32, #tpu.memory_space<vmem>>, vector<2x32xf32>
    %cst_5 = arith.constant dense<0.000000e+00> : vector<2x2xf32>
    %5 = tpu.matmul %3, %4, %cst_5 {dimension_numbers = #tpu.dot_dimension_numbers<[1], [1], [0], [0], [0, 0, 1, 0], [], []>} : vector<2x32xf32>, vector<2x32xf32>, vector<2x2xf32> -> vector<2x2xf32>
    %cst_6 = arith.constant 0.000000e+00 : f32
    %6 = vector.broadcast %cst_6 : f32 to vector<2x2xf32>
    %7 = arith.maximumf %5, %6 : vector<2x2xf32>
    %c0_7 = arith.constant 0 : index
    %c0_8 = arith.constant 0 : index
    %8 = vector.load %arg3[%c0_7, %c0_8] : memref<32x2xf32, #tpu.memory_space<vmem>>, vector<32x2xf32>
    %cst_9 = arith.constant dense<0.000000e+00> : vector<2x32xf32>
    %9 = tpu.matmul %7, %8, %cst_9 {dimension_numbers = #tpu.dot_dimension_numbers<[1], [1], [0], [0], [0, 0, 1, 0], [], []>} : vector<2x2xf32>, vector<32x2xf32>, vector<2x32xf32> -> vector<2x32xf32>
    %cst_10 = arith.constant 0.000000e+00 : f32
    %10 = vector.broadcast %cst_10 : f32 to vector<2x32xf32>
    %11 = arith.subf %10, %9 : vector<2x32xf32>
    %12 = math.exp %11 : vector<2x32xf32>
    %cst_11 = arith.constant 1.000000e+00 : f32
    %13 = vector.broadcast %cst_11 : f32 to vector<2x32xf32>
    %14 = arith.addf %13, %12 : vector<2x32xf32>
    %cst_12 = arith.constant 1.000000e+00 : f32
    %15 = vector.broadcast %cst_12 : f32 to vector<2x32xf32>
    %16 = arith.divf %15, %14 : vector<2x32xf32>
    %17 = vector.shape_cast %16 : vector<2x32xf32> to vector<2x32x1xf32>
    %18 = vector.broadcast %17 : vector<2x32x1xf32> to vector<2x32x256xf32>
    %19 = arith.addf %0, %18 : vector<2x32x256xf32>
    %c0_13 = arith.constant 0 : index
    %c0_14 = arith.constant 0 : index
    %c0_15 = arith.constant 0 : index
    %20 = vector.load %arg4[%c0_13, %c0_14, %c0_15] : memref<2x32x256xf32, #tpu.memory_space<vmem>>, vector<2x32x256xf32>
    tpu.vector_store %arg4[%c0_13, %c0_14, %c0_15], %19 {strides = array<i32>} : memref<2x32x256xf32, #tpu.memory_space<vmem>>, vector<2x32x256xf32>,
    return
  }
  func.func @transform_0(%arg0: i32) -> (i32, i32, i32) {
    %c0_i32 = arith.constant 0 : i32
    %c0_i32_0 = arith.constant 0 : i32
    %c0_i32_1 = arith.constant 0 : i32
    return %arg0, %c0_i32, %c0_i32_0 : i32, i32, i32
  }
  func.func @transform_1(%arg0: i32) -> (i32, i32) {
    %c0_i32 = arith.constant 0 : i32
    %c0_i32_0 = arith.constant 0 : i32
    %c0_i32_1 = arith.constant 0 : i32
    return %c0_i32, %c0_i32_0 : i32, i32
  }
  func.func @transform_2(%arg0: i32) -> (i32, i32) {
    %c0_i32 = arith.constant 0 : i32
    %c0_i32_0 = arith.constant 0 : i32
    %c0_i32_1 = arith.constant 0 : i32
    return %c0_i32, %c0_i32_0 : i32, i32
  }
  func.func @transform_3(%arg0: i32) -> (i32, i32, i32) {
    %c0_i32 = arith.constant 0 : i32
    %c0_i32_0 = arith.constant 0 : i32
    %c0_i32_1 = arith.constant 0 : i32
    return %arg0, %c0_i32, %c0_i32_0 : i32, i32, i32
  }
}

</mosaic_0001>

<llo_original>
// kernel: tpu_custom_call.1
$region0: #{tpu_custom_call.1}
  #allocation0 [shape = 'u32[]', space=smem, size = 0x4, offset = 0x4, fixed_abs, tag = 'smem constant byte address 0x4 - core index']
  #allocation1 [shape = 'u32[144,128]{1,0:T(1,128)}', space=vmem, size = 0x12000, scoped, tag = 'internal scratch']
  %s0 = inlined_call_operand.hbm [shape: f32[2,32,256], index: 0, kind: input, shape index: {}]
  %s1 = inlined_call_operand.vmem [shape: f32[2,32], index: 1, kind: input, shape index: {}]
  %s2 = inlined_call_operand.vmem [shape: f32[32,2], index: 2, kind: input, shape index: {}]
  %s3 = inlined_call_operand.hbm [shape: f32[2,32,256], index: 3, kind: output, shape index: {}]
  %s4 = sld [smem:[#allocation0]]
  $region26: #{tpu_custom_call.1} parent=0
    _
  %s6 = ssub.s32 1, %s4
  %s7 = scalar_select 0, %s6, %s4
  $region1: #{tpu_custom_call.1} parent=0
    #allocation2 [shape = 'u8[65536]{0}', space=vmem, size = 0x10000, scoped, tag = 'input window, operand 0, single buffered']
    #allocation3 [shape = 's32[1]{0}', space=sflag, size = 0x4, scoped, tag = 'scoped memory for tpu_custom_call.1']
    #allocation4 [shape = 's32[1]{0}', space=sflag, size = 0x4, scoped, tag = 'scoped memory for tpu_custom_call.1']
    #allocation5 [shape = 'u8[65536]{0}', space=vmem, size = 0x10000, scoped, tag = 'output window, operand 0, single buffered']
    %8 = vsyncpa [#allocation3], 0
    %9 = vsyncpa [#allocation4], 0
    // Predicated region
    $region2: #{tpu_custom_call.1} parent=1 // pred_check
      _
    $region3: #{tpu_custom_call.1} parent=1 // pred_check_branch
      %11 = sbr.rel (0) target = $region5
    $region4: #{tpu_custom_call.1} parent=1 // pred_region
      %s13 = ssub.s32 2048, 2048
      %14 = vsyncadd [#allocation3], %s13
      %s15 = sshll.u32 [#allocation2], 4
      %s16 = int_to_ptr.vmem [resolvable:$true] %s15
      %21 = dma.hbm_to_vmem [thread:$0]  %s0, 2048, %s16, [#allocation3], 256, 256, 16
    $region5: #{tpu_custom_call.1} parent=1 // pred_fallthru
      _
    // Predicated region
    $region6: #{tpu_custom_call.1} parent=1 // pred_check
      _
    $region7: #{tpu_custom_call.1} parent=1 // pred_check_branch
      %23 = sbr.rel (0) target = $region9
    $region8: #{tpu_custom_call.1} parent=1 // pred_region
      _
    $region9: #{tpu_custom_call.1} parent=1 // pred_fallthru
      _
    // Predicated region
    $region10: #{tpu_custom_call.1} parent=1 // pred_check
      _
    $region11: #{tpu_custom_call.1} parent=1 // pred_check_branch
      %25 = sbr.rel (0) target = $region13
    $region12: #{tpu_custom_call.1} parent=1 // pred_region
      _
    $region13: #{tpu_custom_call.1} parent=1 // pred_fallthru
      _
    // Predicated region
    $region14: #{tpu_custom_call.1} parent=1 // pred_check
      _
    $region15: #{tpu_custom_call.1} parent=1 // pred_check_branch
      %27 = sbr.rel (0) target = $region17
    $region16: #{tpu_custom_call.1} parent=1 // pred_region
      %28 = dma.done [#allocation3], 2048
    $region17: #{tpu_custom_call.1} parent=1 // pred_fallthru
      _
    %v29 = vld [vmem:[#allocation2] sm:$0xff]
    %v30 = vld [vmem:[#allocation2 + $0x8] sm:$0xff]
    %v31 = vld [vmem:[#allocation2 + $0x10] sm:$0xff]
    %v32 = vld [vmem:[#allocation2 + $0x18] sm:$0xff]
    %v33 = vld [vmem:[#allocation2 + $0x20] sm:$0xff]
    %v34 = vld [vmem:[#allocation2 + $0x28] sm:$0xff]
    %v35 = vld [vmem:[#allocation2 + $0x30] sm:$0xff]
    %v36 = vld [vmem:[#allocation2 + $0x38] sm:$0xff]
    %v37 = vld [vmem:[#allocation2 + $0x40] sm:$0xff]
    %v38 = vld [vmem:[#allocation2 + $0x48] sm:$0xff]
    %v39 = vld [vmem:[#allocation2 + $0x50] sm:$0xff]
    %v40 = vld [vmem:[#allocation2 + $0x58] sm:$0xff]
    %v41 = vld [vmem:[#allocation2 + $0x60] sm:$0xff]
    %v42 = vld [vmem:[#allocation2 + $0x68] sm:$0xff]
    %v43 = vld [vmem:[#allocation2 + $0x70] sm:$0xff]
    %v44 = vld [vmem:[#allocation2 + $0x78] sm:$0xff]
    %v45 = vadd.f32 %v29, %v30
    %46 = vadd.xlane.f32.xlu0 %v45
    %v47 = vpop.xlane.xlu0 %46
    %v48 = vadd.f32 %v31, %v32
    %49 = vadd.xlane.f32.xlu0 %v48
    %v50 = vpop.xlane.xlu0 %49
    %v51 = vadd.f32 %v33, %v34
    %52 = vadd.xlane.f32.xlu0 %v51
    %v53 = vpop.xlane.xlu0 %52
    %v54 = vadd.f32 %v35, %v36
    %55 = vadd.xlane.f32.xlu0 %v54
    %v56 = vpop.xlane.xlu0 %55
    %v57 = vadd.f32 %v37, %v38
    %58 = vadd.xlane.f32.xlu0 %v57
    %v59 = vpop.xlane.xlu0 %58
    %v60 = vadd.f32 %v39, %v40
    %61 = vadd.xlane.f32.xlu0 %v60
    %v62 = vpop.xlane.xlu0 %61
    %v63 = vadd.f32 %v41, %v42
    %64 = vadd.xlane.f32.xlu0 %v63
    %v65 = vpop.xlane.xlu0 %64
    %v66 = vadd.f32 %v43, %v44
    %67 = vadd.xlane.f32.xlu0 %v66
    %v68 = vpop.xlane.xlu0 %67
    %v69 = vmul.f32 %v47, 0.00390625
    %v70 = vmul.f32 %v50, 0.00390625
    %v71 = vmul.f32 %v53, 0.00390625
    %v72 = vmul.f32 %v56, 0.00390625
    %v73 = vmul.f32 %v59, 0.00390625
    %v74 = vmul.f32 %v62, 0.00390625
    %v75 = vmul.f32 %v65, 0.00390625
    %v76 = vmul.f32 %v68, 0.00390625
    %v77 = vld [vmem:[%s1] sm:$0x3]
    %v86 = vlaneseq
    %v87 = vand.u32 %v86, 127
    %v88 = vlaneseq
    %v89 = vshrl.u32 %v88, 7
    %v90 = vsub.s32 %v87, %v89
    %v91 = vrot.slane %v69, %v90
    %v92 = vadd.s32 %v87, 4294967288
    %v93 = vlaneseq
    %v94 = vshrl.u32 %v93, 7
    %v95 = vsub.s32 %v92, %v94
    %v96 = vrot.slane %v70, %v95
    %vm97 = vcmask 130112
    %v98 = vsel %vm97, %v96, %v91
    %v99 = vadd.s32 %v87, 4294967280
    %v100 = vlaneseq
    %v101 = vshrl.u32 %v100, 7
    %v102 = vsub.s32 %v99, %v101
    %v103 = vrot.slane %v71, %v102
    %vm104 = vcmask 195712
    %v105 = vsel %vm104, %v103, %v98
    %v106 = vadd.s32 %v87, 4294967272
    %v107 = vlaneseq
    %v108 = vshrl.u32 %v107, 7
    %v109 = vsub.s32 %v106, %v108
    %v110 = vrot.slane %v72, %v109
    %vm111 = vcmask 261312
    %v112 = vsel %vm111, %v110, %v105
    %v113 = vlaneseq
    %v114 = vshrl.u32 %v113, 7
    %v115 = vsub.s32 %v87, %v114
    %v116 = vrot.slane %v73, %v115
    %v117 = vlaneseq
    %v118 = vshrl.u32 %v117, 7
    %v119 = vsub.s32 %v92, %v118
    %v120 = vrot.slane %v74, %v119
    %v121 = vsel %vm97, %v120, %v116
    %v122 = vlaneseq
    %v123 = vshrl.u32 %v122, 7
    %v124 = vsub.s32 %v99, %v123
    %v125 = vrot.slane %v75, %v124
    %v126 = vsel %vm104, %v125, %v121
    %v127 = vlaneseq
    %v128 = vshrl.u32 %v127, 7
    %v129 = vsub.s32 %v106, %v128
    %v130 = vrot.slane %v76, %v129
    %v131 = vsel %vm111, %v130, %v126
    %vm132 = vcmask 1041409
    %v133 = vsel %vm132, %v131, %v112
    %vm134 = vcmask 261120
    %v135 = vsel %vm134, %v133, 0
    %v138 = vsel %vm134, %v77, 0
    %140 = vmatprep.subr.mxu0 0.0
    %141 = vmatpush1.xpose.msra.mxu0 %v138
    %142 = vmatprep.subr.mxu0 0.0
    %143 = vmatpush1.xpose.msra.mxu0 0.0
    %144 = vmatprep.subr.mxu0 0.0
    %145 = vmatpush1.xpose.msra.mxu0 0.0
    %146 = vmatprep.subr.mxu0 0.0
    %147 = vmatpush1.xpose.msra.mxu0 0.0
    %148 = vmatprep.subr.mxu0 0.0
    %149 = vmatpush1.xpose.msra.mxu0 0.0
    %150 = vmatprep.subr.mxu0 0.0
    %151 = vmatpush1.xpose.msra.mxu0 0.0
    %152 = vmatprep.subr.mxu0 0.0
    %153 = vmatpush1.xpose.msra.mxu0 0.0
    %154 = vmatprep.subr.mxu0 0.0
    %155 = vmatpush1.xpose.msra.mxu0 0.0
    %156 = vmatprep.subr.mxu0 0.0
    %157 = vmatpush1.xpose.msra.mxu0 0.0
    %158 = vmatprep.subr.mxu0 0.0
    %159 = vmatpush1.xpose.msra.mxu0 0.0
    %160 = vmatprep.subr.mxu0 0.0
    %161 = vmatpush1.xpose.msra.mxu0 0.0
    %162 = vmatprep.subr.mxu0 0.0
    %163 = vmatpush1.xpose.msra.mxu0 0.0
    %164 = vmatprep.subr.mxu0 0.0
    %165 = vmatpush1.xpose.msra.mxu0 0.0
    %166 = vmatprep.subr.mxu0 0.0
    %167 = vmatpush1.xpose.msra.mxu0 0.0
    %168 = vmatprep.subr.mxu0 0.0
    %169 = vmatpush1.xpose.msra.mxu0 0.0
    %170 = vmatprep.subr.mxu0 0.0
    %171 = vmatpush1.xpose.msra.mxu0 0.0
    %172 = vmatprep.subr.mxu0 0.0
    %173 = vmatpush1.xpose.msra.mxu0 0.0
    %174 = vmatprep.subr.mxu0 0.0
    %175 = vmatpush1.xpose.msra.mxu0 0.0
    %176 = vmatprep.subr.mxu0 0.0
    %177 = vmatpush1.xpose.msra.mxu0 0.0
    %178 = vmatprep.subr.mxu0 0.0
    %179 = vmatpush1.xpose.msra.mxu0 0.0
    %180 = vmatprep.subr.mxu0 0.0
    %181 = vmatpush1.xpose.msra.mxu0 0.0
    %182 = vmatprep.subr.mxu0 0.0
    %183 = vmatpush1.xpose.msra.mxu0 0.0
    %184 = vmatprep.subr.mxu0 0.0
    %185 = vmatpush1.xpose.msra.mxu0 0.0
    %186 = vmatprep.subr.mxu0 0.0
    %187 = vmatpush1.xpose.msra.mxu0 0.0
    %188 = vmatprep.subr.mxu0 0.0
    %189 = vmatpush1.xpose.msra.mxu0 0.0
    %190 = vmatprep.subr.mxu0 0.0
    %191 = vmatpush1.xpose.msra.mxu0 0.0
    %192 = vmatprep.subr.mxu0 0.0
    %193 = vmatpush1.xpose.msra.mxu0 0.0
    %194 = vmatprep.subr.mxu0 0.0
    %195 = vmatpush1.xpose.msra.mxu0 0.0
    %196 = vmatprep.subr.mxu0 0.0
    %197 = vmatpush1.xpose.msra.mxu0 0.0
    %198 = vmatprep.subr.mxu0 0.0
    %199 = vmatpush1.xpose.msra.mxu0 0.0
    %200 = vmatprep.subr.mxu0 0.0
    %201 = vmatpush1.xpose.msra.mxu0 0.0
    %202 = vmatprep.subr.mxu0 0.0
    %203 = vmatpush1.xpose.msra.mxu0 0.0
    %204 = vmatprep.mubr.f32.mxu0 0.0
    %205 = vmatmul.mubr.f32.gmra.mrb[0].mxu0 %v135
    %v206 = vpop.f32.mrb[0].mxu0
    %v207 = vadd.f32 0.0, %v206
    %v208 = vpop.f32.mrb[0].mxu0
    %209 = vdwg.mxu0
    %v210 = vmax.f32 %v207, 0.0
    %v211 = vld [vmem:[%s2] sm:$0xff]
    %v212 = vld [vmem:[%s2 + $0x8] sm:$0xff]
    %v213 = vld [vmem:[%s2 + $0x10] sm:$0xff]
    %v214 = vld [vmem:[%s2 + $0x18] sm:$0xff]
    %vm215 = vcmask 15360
    %v217 = vsel %vm215, %v210, 0
    %v220 = vsel %vm215, %v211, 0
    %v223 = vsel %vm215, %v212, 0
    %v226 = vsel %vm215, %v213, 0
    %v229 = vsel %vm215, %v214, 0
    %231 = vmatprep.subr.mxu0 0.0
    %232 = vmatpush1.xpose.msra.mxu0 %v220
    %233 = vmatprep.subr.mxu0 0.0
    %234 = vmatpush1.xpose.msra.mxu0 %v223
    %235 = vmatprep.subr.mxu0 0.0
    %236 = vmatpush1.xpose.msra.mxu0 %v226
    %237 = vmatprep.subr.mxu0 0.0
    %238 = vmatpush1.xpose.msra.mxu0 %v229
    %239 = vmatprep.subr.mxu0 0.0
    %240 = vmatpush1.xpose.msra.mxu0 0.0
    %241 = vmatprep.subr.mxu0 0.0
    %242 = vmatpush1.xpose.msra.mxu0 0.0
    %243 = vmatprep.subr.mxu0 0.0
    %244 = vmatpush1.xpose.msra.mxu0 0.0
    %245 = vmatprep.subr.mxu0 0.0
    %246 = vmatpush1.xpose.msra.mxu0 0.0
    %247 = vmatprep.subr.mxu0 0.0
    %248 = vmatpush1.xpose.msra.mxu0 0.0
    %249 = vmatprep.subr.mxu0 0.0
    %250 = vmatpush1.xpose.msra.mxu0 0.0
    %251 = vmatprep.subr.mxu0 0.0
    %252 = vmatpush1.xpose.msra.mxu0 0.0
    %253 = vmatprep.subr.mxu0 0.0
    %254 = vmatpush1.xpose.msra.mxu0 0.0
    %255 = vmatprep.subr.mxu0 0.0
    %256 = vmatpush1.xpose.msra.mxu0 0.0
    %257 = vmatprep.subr.mxu0 0.0
    %258 = vmatpush1.xpose.msra.mxu0 0.0
    %259 = vmatprep.subr.mxu0 0.0
    %260 = vmatpush1.xpose.msra.mxu0 0.0
    %261 = vmatprep.subr.mxu0 0.0
    %262 = vmatpush1.xpose.msra.mxu0 0.0
    %263 = vmatprep.subr.mxu0 0.0
    %264 = vmatpush1.xpose.msra.mxu0 0.0
    %265 = vmatprep.subr.mxu0 0.0
    %266 = vmatpush1.xpose.msra.mxu0 0.0
    %267 = vmatprep.subr.mxu0 0.0
    %268 = vmatpush1.xpose.msra.mxu0 0.0
    %269 = vmatprep.subr.mxu0 0.0
    %270 = vmatpush1.xpose.msra.mxu0 0.0
    %271 = vmatprep.subr.mxu0 0.0
    %272 = vmatpush1.xpose.msra.mxu0 0.0
    %273 = vmatprep.subr.mxu0 0.0
    %274 = vmatpush1.xpose.msra.mxu0 0.0
    %275 = vmatprep.subr.mxu0 0.0
    %276 = vmatpush1.xpose.msra.mxu0 0.0
    %277 = vmatprep.subr.mxu0 0.0
    %278 = vmatpush1.xpose.msra.mxu0 0.0
    %279 = vmatprep.subr.mxu0 0.0
    %280 = vmatpush1.xpose.msra.mxu0 0.0
    %281 = vmatprep.subr.mxu0 0.0
    %282 = vmatpush1.xpose.msra.mxu0 0.0
    %283 = vmatprep.subr.mxu0 0.0
    %284 = vmatpush1.xpose.msra.mxu0 0.0
    %285 = vmatprep.subr.mxu0 0.0
    %286 = vmatpush1.xpose.msra.mxu0 0.0
    %287 = vmatprep.subr.mxu0 0.0
    %288 = vmatpush1.xpose.msra.mxu0 0.0
    %289 = vmatprep.subr.mxu0 0.0
    %290 = vmatpush1.xpose.msra.mxu0 0.0
    %291 = vmatprep.subr.mxu0 0.0
    %292 = vmatpush1.xpose.msra.mxu0 0.0
    %293 = vmatprep.subr.mxu0 0.0
    %294 = vmatpush1.xpose.msra.mxu0 0.0
    %295 = vmatprep.mubr.f32.mxu0 0.0
    %296 = vmatmul.mubr.f32.gmra.mrb[0].mxu0 %v217
    %v297 = vpop.f32.mrb[0].mxu0
    %v298 = vadd.f32 0.0, %v297
    %v299 = vpop.f32.mrb[0].mxu0
    %300 = vdwg.mxu0
    %v301 = vsub.f32 0.0, %v298
    %v302 = vmul.f32 %v301, 1.442695
    %v303 = vpow.pop %v302
    %v304 = vadd.f32 %v303, 1.0
    %v305 = vrcp.pop %v304
    %v306 = vmul.f32 1.0, %v305
    %v307 = vlaneseq
    %v308 = vshrl.u32 %v307, 7
    %v309 = vsub.s32 0, %v308
    %v310 = vrot.slane %v306, %v309
    %312 = vbcast.lane.b32.xlu0 %v310, 256
    %v313 = vpop.permute.xlu0 %312
    %s315 = sor.u32 256, 8
    %316 = vbcast.lane.b32.xlu0 %v310, %s315
    %v317 = vpop.permute.xlu0 %316
    %s319 = sor.u32 256, 16
    %320 = vbcast.lane.b32.xlu0 %v310, %s319
    %v321 = vpop.permute.xlu0 %320
    %s323 = sor.u32 256, 24
    %324 = vbcast.lane.b32.xlu0 %v310, %s323
    %v325 = vpop.permute.xlu0 %324
    %v326 = vlaneseq
    %v327 = vshrl.u32 %v326, 7
    %v328 = vsub.s32 1, %v327
    %v329 = vrot.slane %v306, %v328
    %331 = vbcast.lane.b32.xlu0 %v329, 256
    %v332 = vpop.permute.xlu0 %331
    %s334 = sor.u32 256, 8
    %335 = vbcast.lane.b32.xlu0 %v329, %s334
    %v336 = vpop.permute.xlu0 %335
    %s338 = sor.u32 256, 16
    %339 = vbcast.lane.b32.xlu0 %v329, %s338
    %v340 = vpop.permute.xlu0 %339
    %s342 = sor.u32 256, 24
    %343 = vbcast.lane.b32.xlu0 %v329, %s342
    %v344 = vpop.permute.xlu0 %343
    %v345 = vadd.f32 %v29, %v313
    %v346 = vadd.f32 %v30, %v313
    %v347 = vadd.f32 %v31, %v317
    %v348 = vadd.f32 %v32, %v317
    %v349 = vadd.f32 %v33, %v321
    %v350 = vadd.f32 %v34, %v321
    %v351 = vadd.f32 %v35, %v325
    %v352 = vadd.f32 %v36, %v325
    %v353 = vadd.f32 %v37, %v332
    %v354 = vadd.f32 %v38, %v332
    %v355 = vadd.f32 %v39, %v336
    %v356 = vadd.f32 %v40, %v336
    %v357 = vadd.f32 %v41, %v340
    %v358 = vadd.f32 %v42, %v340
    %v359 = vadd.f32 %v43, %v344
    %v360 = vadd.f32 %v44, %v344
    %361 = vst [vmem:[#allocation5] sm:$0xff] %v345
    %362 = vst [vmem:[#allocation5 + $0x8] sm:$0xff] %v346
    %363 = vst [vmem:[#allocation5 + $0x10] sm:$0xff] %v347
    %364 = vst [vmem:[#allocation5 + $0x18] sm:$0xff] %v348
    %365 = vst [vmem:[#allocation5 + $0x20] sm:$0xff] %v349
    %366 = vst [vmem:[#allocation5 + $0x28] sm:$0xff] %v350
    %367 = vst [vmem:[#allocation5 + $0x30] sm:$0xff] %v351
    %368 = vst [vmem:[#allocation5 + $0x38] sm:$0xff] %v352
    %369 = vst [vmem:[#allocation5 + $0x40] sm:$0xff] %v353
    %370 = vst [vmem:[#allocation5 + $0x48] sm:$0xff] %v354
    %371 = vst [vmem:[#allocation5 + $0x50] sm:$0xff] %v355
    %372 = vst [vmem:[#allocation5 + $0x58] sm:$0xff] %v356
    %373 = vst [vmem:[#allocation5 + $0x60] sm:$0xff] %v357
    %374 = vst [vmem:[#allocation5 + $0x68] sm:$0xff] %v358
    %375 = vst [vmem:[#allocation5 + $0x70] sm:$0xff] %v359
    %376 = vst [vmem:[#allocation5 + $0x78] sm:$0xff] %v360
    // Predicated region
    $region18: #{tpu_custom_call.1} parent=1 // pred_check
      _
    $region19: #{tpu_custom_call.1} parent=1 // pred_check_branch
      %378 = sbr.rel (0) target = $region21
    $region20: #{tpu_custom_call.1} parent=1 // pred_region
      %s380 = ssub.s32 2048, 2048
      %381 = vsyncadd [#allocation4], %s380
      %s382 = sshll.u32 [#allocation5], 4
      %s383 = int_to_ptr.vmem [resolvable:$true] %s382
      %388 = dma.vmem_to_hbm [thread:$0]  %s383, 2048, %s3, [#allocation4], 256, 256, 16
    $region21: #{tpu_custom_call.1} parent=1 // pred_fallthru
      _
    // Predicated region
    $region22: #{tpu_custom_call.1} parent=1 // pred_check
      _
    $region23: #{tpu_custom_call.1} parent=1 // pred_check_branch
      %390 = sbr.rel (0) target = $region25
    $region24: #{tpu_custom_call.1} parent=1 // pred_region
      %391 = dma.done [#allocation4], 2048
    $region25: #{tpu_custom_call.1} parent=1 // pred_fallthru
      _
    %392 = vsyncpa [#allocation3], 1
    %393 = vsyncpa [#allocation4], 1

</llo_original>
